<compile_context>
chip_gen: v7x
topology: tpu7x:2x2x1
jax: 0.10.0
libtpu: 0.0.40
codegen_flags: <defaults>
</compile_context>

<pallas_src>
import functools

import jax
import jax.numpy as jnp
import numpy as np
from jax.experimental import pallas as pl
from jax.experimental.pallas import tpu as pltpu

_EPS = 1.1920929e-07  # torch.finfo(float32).eps, used by nn.RMSNorm(eps=None)


def _rms_norm(x, w):
    ms = jnp.mean(x * x, axis=-1, keepdims=True)
    return x * jax.lax.rsqrt(ms + _EPS) * w


# --------------------------------------------------------------------------------------
# Prologue kernel: shared KV-latent path, once per (batch, seq tile).
# --------------------------------------------------------------------------------------
def _latent_kernel(x_ref, wkv_lat_ref, kvnw_ref, wkv_rope_ref, ckv_ref, krope_ref):
    x = x_ref[0]                                                       # (TS, D) bf16
    c = jnp.dot(x, wkv_lat_ref[...], preferred_element_type=jnp.float32)
    ckv_ref[0] = _rms_norm(c, kvnw_ref[...]).astype(jnp.bfloat16)      # (TS, r)
    # RoPE rotation already folded into wkv_rope in the wrapper.
    krope_ref[0] = jnp.dot(x, wkv_rope_ref[...],
                           preferred_element_type=jnp.float32).astype(jnp.bfloat16)


# --------------------------------------------------------------------------------------
# Attention kernel: one grid step = (batch b, query tile qi, kv tile ki).
# --------------------------------------------------------------------------------------
def _mla_attn_kernel(xq_ref, ckv_ref, krope_ref,
                     wq_d_ref, qnw_ref, wq_nope_ref, wq_rope_ref, wo_abs_ref,
                     o_ref,
                     qn_sc, qr_sc, m_sc, l_sc, acc_sc,
                     *, heads, kv_rank, rope_dim, exp_dtype):
    ki = pl.program_id(2)
    tq = xq_ref.shape[1]

    # ---- query path, once per q tile (W_UK, RoPE R and softmax scale folded in). ----
    @pl.when(ki == 0)
    def _():
        xq = xq_ref[0]                                                 # (TQ, D) bf16
        q_lat = jnp.dot(xq, wq_d_ref[...], preferred_element_type=jnp.float32)
        q_lat = _rms_norm(q_lat, qnw_ref[...]).astype(jnp.bfloat16)    # (TQ, q_rank)
        qn = jnp.dot(q_lat, wq_nope_ref[...], preferred_element_type=jnp.float32)
        qr = jnp.dot(q_lat, wq_rope_ref[...], preferred_element_type=jnp.float32)
        # heads batched along the sublane (row) axis: rows = TQ * H.
        qn_sc[...] = qn.reshape(tq * heads, kv_rank).astype(jnp.bfloat16)
        qr_sc[...] = qr.reshape(tq * heads, rope_dim).astype(jnp.bfloat16)
        m_sc[...] = jnp.full_like(m_sc, -jnp.inf)
        l_sc[...] = jnp.zeros_like(l_sc)
        acc_sc[...] = jnp.zeros_like(acc_sc)

    # ---- online-softmax flash step against the shared latent (no per-head K/V). ----
    # TODO(synk): mask=None path only; the masked_fill branch is not implemented.
    ckv = ckv_ref[0]                                                   # (TK, r)    bf16
    kr = krope_ref[0]                                                  # (TK, rope) bf16
    dims = (((1,), (1,)), ((), ()))
    scores = (jax.lax.dot_general(qn_sc[...], ckv, dims, preferred_element_type=jnp.float32)
              + jax.lax.dot_general(qr_sc[...], kr, dims, preferred_element_type=jnp.float32))

    m_prev = m_sc[...]
    m_new = jnp.maximum(m_prev, jnp.max(scores, axis=-1, keepdims=True))
    alpha = jnp.exp(m_prev - m_new)
    p = jnp.exp((scores - m_new).astype(exp_dtype))                    # bf16 EUP on v6e/v7x
    l_sc[...] = alpha * l_sc[...] + jnp.sum(p.astype(jnp.float32), axis=-1, keepdims=True)
    acc_sc[...] = alpha * acc_sc[...] + jnp.dot(p.astype(jnp.bfloat16), ckv,
                                                preferred_element_type=jnp.float32)
    m_sc[...] = m_new

    # ---- finalize: normalize the small PV accumulator, fused output projection. ----
    @pl.when(ki == pl.num_programs(2) - 1)
    def _():
        pv = acc_sc[...] * pl.reciprocal(l_sc[...], approx=True)       # (TQ*H, r)
        pv_flat = pv.reshape(tq, heads * kv_rank).astype(jnp.bfloat16)
        o_ref[0] = jnp.dot(pv_flat, wo_abs_ref[...], preferred_element_type=jnp.float32)


# --------------------------------------------------------------------------------------
# Wrapper helpers.
# --------------------------------------------------------------------------------------
def _absorb_weights(params, R, *, heads, head_dim, v_head_dim, rope_dim, kv_rank, scale):
    wq_d, qnw, wq_u, wkv_d, kvnw, wkv_u, wo = params
    q_rank = wq_d.shape[1]
    d = wq_d.shape[0]
    qk_hd = head_dim + rope_dim

    wq_u_h = wq_u.reshape(q_rank, heads, qk_hd)
    wq_u_nope = wq_u_h[..., :head_dim]                       # (q_rank, H, hd)
    wq_u_rope = wq_u_h[..., head_dim:]                       # (q_rank, H, rope)

    wkv_u_h = wkv_u.reshape(kv_rank, heads, head_dim + v_head_dim)
    w_uk = wkv_u_h[..., :head_dim]                           # (r, H, hd)
    w_uv = wkv_u_h[..., head_dim:]                           # (r, H, vd)
    wo_h = wo.reshape(heads, v_head_dim, d)                  # (H, vd, D)

    # q path: absorb W_UK (nope scores), fold RoPE R (rope scores) and the softmax scale.
    wq_nope_abs = (jnp.einsum('qhd,rhd->qhr', wq_u_nope, w_uk) * scale)
    wq_rope_abs = (jnp.einsum('qhe,ef->qhf', wq_u_rope, R) * scale)
    wq_nope_abs = wq_nope_abs.reshape(q_rank, heads * kv_rank)
    wq_rope_abs = wq_rope_abs.reshape(q_rank, heads * rope_dim)

    # output path: absorb W_UV into wo.
    wo_abs = jnp.einsum('rhv,hvd->hrd', w_uv, wo_h).reshape(heads * kv_rank, d)

    # kv down-projection: lane-aligned halves, RoPE R folded into the rope half.
    wkv_lat = wkv_d[:, :kv_rank]
    wkv_rope = wkv_d[:, kv_rank:] @ R

    bf = lambda a: a.astype(jnp.bfloat16)   # bf16 MXU operands; accumulation stays f32
    return (bf(wq_d), qnw.astype(jnp.float32), bf(wq_nope_abs), bf(wq_rope_abs),
            bf(wkv_lat), kvnw.astype(jnp.float32), bf(wkv_rope), bf(wo_abs))


def _nbytes(shape, dtype):
    return int(np.prod(shape)) * jnp.dtype(dtype).itemsize


def _pick_tile(n, target):
    if n <= target:
        return n
    for t in range(target, 7, -8):
        if n % t == 0:
            return t
    return n


def _device_kind():
    try:
        return jax.devices()[0].device_kind.lower()
    except Exception:
        return ""


def _vmem_cap_bytes():
    try:
        cap = int(pltpu.get_tpu_info().vmem_capacity_bytes)
        if cap > 0:
            return cap
    except Exception:
        pass
    return 64 * 2**20   # conservative fallback (v7x per-core physical VMEM)


# --------------------------------------------------------------------------------------
# Forward.
# --------------------------------------------------------------------------------------
def mla_forward_pallas(x, params, rope_freq, *, heads, head_dim, v_head_dim,
                       rope_dim, kv_rank, q_tile=None, kv_tile=None):
    b, s, d = x.shape
    qk_hd = head_dim + rope_dim
    scale = float(qk_hd) ** -0.5

    # RoPE rotation matrix from complex_freq[:, s, :, :] — the module indexes a single,
    # position-independent frequency row, so the complex rotation is this fixed linear map
    # (folded into the weights below; exact).
    f = rope_freq[:, s, :, :].reshape(-1)                     # (rope_dim//2,) complex
    c, si = jnp.real(f), jnp.imag(f)
    idx = np.arange(rope_dim // 2)
    R = jnp.zeros((rope_dim, rope_dim), jnp.float32)
    R = R.at[2 * idx, 2 * idx].set(c)
    R = R.at[2 * idx, 2 * idx + 1].set(si)
    R = R.at[2 * idx + 1, 2 * idx].set(-si)
    R = R.at[2 * idx + 1, 2 * idx + 1].set(c)

    (wq_d, qnw, wq_nope_abs, wq_rope_abs,
     wkv_lat, kvnw, wkv_rope, wo_abs) = _absorb_weights(
        params, R, heads=heads, head_dim=head_dim, v_head_dim=v_head_dim,
        rope_dim=rope_dim, kv_rank=kv_rank, scale=scale)

    # bf16 input: halves HBM->VMEM DMA bytes; dots were bf16 already so no accuracy change.
    x_bf = x.astype(jnp.bfloat16)

    kind = _device_kind()
    is_v5_or_older = any(t in kind for t in ("v2", "v3", "v4", "v5"))
    exp_dtype = jnp.float32 if is_v5_or_older else jnp.bfloat16   # bf16 EUP only on v6e/v7x
    vmem_cap = int(0.85 * _vmem_cap_bytes())                      # leave compiler headroom

    # ---------------- prologue: shared KV latents, once per batch ----------------
    ts = _pick_tile(s, 512)
    lat_w_bytes = sum(_nbytes(a.shape, a.dtype) for a in (wkv_lat, kvnw, wkv_rope))
    lat_need = (2 * lat_w_bytes
                + 2 * (2 * ts * d + 2 * ts * (kv_rank + rope_dim))    # double-buffered I/O
                + 8 * ts * (kv_rank + rope_dim))                      # f32 intermediates
    lat_vmem = int(min(vmem_cap, max(32 * 2**20, 2 * lat_need)))

    ckv, krope = pl.pallas_call(
        _latent_kernel,
        out_shape=(jax.ShapeDtypeStruct((b, s, kv_rank), jnp.bfloat16),
                   jax.ShapeDtypeStruct((b, s, rope_dim), jnp.bfloat16)),
        grid_spec=pltpu.PrefetchScalarGridSpec(
            num_scalar_prefetch=0,
            grid=(b, s // ts),
            in_specs=[
                pl.BlockSpec((1, ts, d), lambda b_, s_: (b_, s_, 0)),
                pl.BlockSpec(wkv_lat.shape, lambda b_, s_: (0, 0)),
                pl.BlockSpec(kvnw.shape, lambda b_, s_: (0, 0)),
                pl.BlockSpec(wkv_rope.shape, lambda b_, s_: (0, 0)),
            ],
            out_specs=[
                pl.BlockSpec((1, ts, kv_rank), lambda b_, s_: (b_, s_, 0)),
                pl.BlockSpec((1, ts, rope_dim), lambda b_, s_: (b_, s_, 0)),
            ]),
        compiler_params=pltpu.CompilerParams(
            dimension_semantics=("parallel", "parallel"),
            vmem_limit_bytes=lat_vmem),
    )(x_bf, wkv_lat, kvnw, wkv_rope)

    # ---------------- attention: (batch, q tile, kv tile) flash grid ----------------
    tq = q_tile if q_tile is not None else _pick_tile(s, 256 if "v6" in kind else 128)
    tk = kv_tile if kv_tile is not None else _pick_tile(s, 512)
    assert s % tq == 0 and s % tk == 0, "sequence length must be divisible by the tiles"
    nq, nk = s // tq, s // tk
    rows = tq * heads

    weight_bytes = sum(_nbytes(a.shape, a.dtype) for a in
                       (wq_d, qnw, wq_nope_abs, wq_rope_abs, wo_abs))
    io_bytes = 2 * (2 * tq * d + 2 * tk * (kv_rank + rope_dim) + 4 * tq * d)
    scratch_bytes = rows * (2 * kv_rank + 2 * rope_dim + 4 * kv_rank + 8)
    interm_bytes = (rows * tk * (8 + jnp.dtype(exp_dtype).itemsize)
                    + 4 * tq * (wq_nope_abs.shape[1] + wq_rope_abs.shape[1])
                    + 8 * tq * wq_d.shape[1] + 8 * tq * d)
    need = 2 * weight_bytes + io_bytes + scratch_bytes + interm_bytes
    vmem_limit = int(min(vmem_cap, max(32 * 2**20, 2 * need)))

    kernel = functools.partial(_mla_attn_kernel, heads=heads, kv_rank=kv_rank,
                               rope_dim=rope_dim, exp_dtype=exp_dtype)

    def wspec(arr):  # whole-array weight block, constant index_map (fetched once)
        return pl.BlockSpec(arr.shape, lambda b_, q_, k_: (0, 0))

    return pl.pallas_call(
        kernel,
        out_shape=jax.ShapeDtypeStruct((b, s, d), jnp.float32),
        grid_spec=pltpu.PrefetchScalarGridSpec(
            num_scalar_prefetch=0,
            grid=(b, nq, nk),
            in_specs=[
                pl.BlockSpec((1, tq, d), lambda b_, q_, k_: (b_, q_, 0)),        # q tile of x
                pl.BlockSpec((1, tk, kv_rank), lambda b_, q_, k_: (b_, k_, 0)),  # latent K/V
                pl.BlockSpec((1, tk, rope_dim), lambda b_, q_, k_: (b_, k_, 0)), # rope K
                wspec(wq_d), wspec(qnw), wspec(wq_nope_abs), wspec(wq_rope_abs),
                wspec(wo_abs),
            ],
            out_specs=pl.BlockSpec((1, tq, d), lambda b_, q_, k_: (b_, q_, 0)),
            scratch_shapes=[
                pltpu.VMEM((rows, kv_rank), jnp.bfloat16),   # absorbed q (nope)
                pltpu.VMEM((rows, rope_dim), jnp.bfloat16),  # rotated q (rope)
                pltpu.VMEM((rows, 1), jnp.float32),          # m (running max)
                pltpu.VMEM((rows, 1), jnp.float32),          # l (running denom)
                pltpu.VMEM((rows, kv_rank), jnp.float32),    # acc (running PV)
            ]),
        compiler_params=pltpu.CompilerParams(
            dimension_semantics=("parallel", "parallel", "arbitrary"),
            vmem_limit_bytes=vmem_limit),
    )(x_bf, ckv, krope, wq_d, qnw, wq_nope_abs, wq_rope_abs, wo_abs)


# ---------------- pure-JAX reference (mirrors the PyTorch forward, f32) ----------------
def _rope_ref(xr, f):
    b, s, h, dd = xr.shape
    xc = xr.reshape(b, s, h, dd // 2, 2)
    xcpx = jax.lax.complex(xc[..., 0], xc[..., 1])
    out = xcpx * f
    return jnp.stack([jnp.real(out), jnp.imag(out)], axis=-1).reshape(b, s, h, dd)


def mla_ref(x, params, rope_freq, *, heads, head_dim, v_head_dim, rope_dim, kv_rank):
    wq_d, qnw, wq_u, wkv_d, kvnw, wkv_u, wo = params
    b, s, d = x.shape
    qk_hd = head_dim + rope_dim
    scale = float(qk_hd) ** -0.5
    f = rope_freq[:, s, :, :]

    q = _rms_norm(x @ wq_d, qnw) @ wq_u
    q = q.reshape(b, s, heads, qk_hd)
    q = jnp.concatenate([q[..., :head_dim], _rope_ref(q[..., head_dim:], f)], axis=-1)

    kv_c = x @ wkv_d
    kv_lat, k_rope = kv_c[..., :kv_rank], kv_c[..., kv_rank:]
    k_rope = jnp.broadcast_to(_rope_ref(k_rope[:, :, None, :], f), (b, s, heads, rope_dim))
    kv = (_rms_norm(kv_lat, kvnw) @ wkv_u).reshape(b, s, heads, head_dim + v_head_dim)
    k = jnp.concatenate([kv[..., :head_dim], k_rope], axis=-1)
    v = kv[..., head_dim:]

    qT, kT, vT = (jnp.swapaxes(t, 1, 2) for t in (q, k, v))
    scores = jnp.einsum('bhqd,bhkd->bhqk', qT, kT) * scale
    w = jax.nn.softmax(scores, axis=-1)
    out = jnp.einsum('bhqk,bhkd->bhqd', w, vT)
    out = jnp.swapaxes(out, 1, 2).reshape(b, s, heads * v_head_dim)
    return out @ wo


if __name__ == "__main__":
    B, S = 2, 8
    HIDDEN, HEADS = 32, 4
    V_HD, KV_RANK, Q_RANK, ROPE_DIM = 8, 16, 16, 8
    HEAD_DIM = HIDDEN // HEADS
    QK_HD = HEAD_DIM + ROPE_DIM
    S_MAX = 2 * S  # rope_freq table must be longer than s (module indexes position s)

    key = jax.random.PRNGKey(0)
    ks = jax.random.split(key, 10)
    init = lambda k, shape: 0.05 * jax.random.normal(k, shape, jnp.float32)

    wq_d = init(ks[0], (HIDDEN, Q_RANK))
    qnw = 1.0 + init(ks[1], (1, Q_RANK))
    wq_u = init(ks[2], (Q_RANK, HEADS * QK_HD))
    wkv_d = init(ks[3], (HIDDEN, KV_RANK + ROPE_DIM))
    kvnw = 1.0 + init(ks[4], (1, KV_RANK))
    wkv_u = init(ks[5], (KV_RANK, HEADS * (HEAD_DIM + V_HD)))
    wo = init(ks[6], (HEADS * V_HD, HIDDEN))
    params = (wq_d, qnw, wq_u, wkv_d, kvnw, wkv_u, wo)

    x = jax.random.normal(ks[7], (B, S, HIDDEN), jnp.float32)
    theta = jax.random.uniform(ks[8], (1, S_MAX, 1, ROPE_DIM // 2), jnp.float32,
                               0.0, 2.0 * np.pi)
    rope_freq = jax.lax.complex(jnp.cos(theta), jnp.sin(theta))   # unit-modulus complex freqs

    out = mla_forward_pallas(x, params, rope_freq, heads=HEADS, head_dim=HEAD_DIM,
                             v_head_dim=V_HD, rope_dim=ROPE_DIM, kv_rank=KV_RANK)
    out = jax.block_until_ready(out)

    ref = mla_ref(x, params, rope_freq, heads=HEADS, head_dim=HEAD_DIM,
                  v_head_dim=V_HD, rope_dim=ROPE_DIM, kv_rank=KV_RANK)
    # bf16 MXU operands / bf16 exp (v6e+/v7x) / approx reciprocal -> looser tolerance than f32.
    np.testing.assert_allclose(np.asarray(out), np.asarray(ref), atol=5e-3, rtol=5e-2)
    print("KERNEL_OK")
</pallas_src>

<mosaic_0001>
module attributes {stable_mosaic.version = 11 : i64} {
  func.func @_latent_kernel(%arg0: i32, %arg1: i32, %arg2: memref<1x8x32xbf16, #tpu.memory_space<vmem>>, %arg3: memref<32x16xbf16, #tpu.memory_space<vmem>>, %arg4: memref<1x16xf32, #tpu.memory_space<vmem>>, %arg5: memref<32x8xbf16, #tpu.memory_space<vmem>>, %arg6: memref<1x8x16xbf16, #tpu.memory_space<vmem>>, %arg7: memref<1x8x8xbf16, #tpu.memory_space<vmem>>) attributes {dimension_semantics = [#tpu.dimension_semantics<parallel>, #tpu.dimension_semantics<parallel>], iteration_bounds = array<i64: 2, 1>, scalar_prefetch = 0 : i64, scratch_operands = 0 : i64, tpu.core_type = #tpu.core_type<tc>, window_params = [{transform_indices = @transform_0, window_bounds = array<i64: 1, 8, 32>}, {pipeline_mode = #tpu.pipeline_mode<synchronous>, transform_indices = @transform_1, window_bounds = array<i64: 32, 16>}, {pipeline_mode = #tpu.pipeline_mode<synchronous>, transform_indices = @transform_2, window_bounds = array<i64: 1, 16>}, {pipeline_mode = #tpu.pipeline_mode<synchronous>, transform_indices = @transform_3, window_bounds = array<i64: 32, 8>}, {transform_indices = @transform_4, window_bounds = array<i64: 1, 8, 16>}, {transform_indices = @transform_5, window_bounds = array<i64: 1, 8, 8>}]} {
    %c0 = arith.constant 0 : index
    %c0_0 = arith.constant 0 : index
    %c0_1 = arith.constant 0 : index
    %0 = vector.load %arg2[%c0, %c0_0, %c0_1] : memref<1x8x32xbf16, #tpu.memory_space<vmem>>, vector<1x8x32xbf16>
    %1 = vector.shape_cast %0 : vector<1x8x32xbf16> to vector<8x32xbf16>
    %c0_2 = arith.constant 0 : index
    %c0_3 = arith.constant 0 : index
    %2 = vector.load %arg3[%c0_2, %c0_3] : memref<32x16xbf16, #tpu.memory_space<vmem>>, vector<32x16xbf16>
    %cst = arith.constant dense<0.000000e+00> : vector<8x16xf32>
    %3 = tpu.matmul %1, %2, %cst {dimension_numbers = #tpu.dot_dimension_numbers<[1], [0], [0], [1], [0, 0, 1, 1], [], []>} : vector<8x32xbf16>, vector<32x16xbf16>, vector<8x16xf32> -> vector<8x16xf32>
    %c0_4 = arith.constant 0 : index
    %c0_5 = arith.constant 0 : index
    %4 = vector.load %arg4[%c0_4, %c0_5] : memref<1x16xf32, #tpu.memory_space<vmem>>, vector<1x16xf32>
    %5 = arith.mulf %3, %3 : vector<8x16xf32>
    %cst_6 = arith.constant dense<0.000000e+00> : vector<8xf32>
    %6 = vector.multi_reduction <add>, %5, %cst_6 [1] : vector<8x16xf32> to vector<8xf32>
    %7 = vector.shape_cast %6 : vector<8xf32> to vector<8x1xf32>
    %cst_7 = arith.constant 1.600000e+01 : f32
    %8 = vector.broadcast %cst_7 : f32 to vector<8x1xf32>
    %9 = arith.divf %7, %8 : vector<8x1xf32>
    %cst_8 = arith.constant 1.1920929E-7 : f32
    %10 = vector.broadcast %cst_8 : f32 to vector<8x1xf32>
    %11 = arith.addf %9, %10 : vector<8x1xf32>
    %12 = math.rsqrt %11 : vector<8x1xf32>
    %13 = vector.broadcast %12 : vector<8x1xf32> to vector<8x16xf32>
    %14 = arith.mulf %3, %13 : vector<8x16xf32>
    %15 = vector.broadcast %4 : vector<1x16xf32> to vector<8x16xf32>
    %16 = arith.mulf %14, %15 : vector<8x16xf32>
    %17 = arith.truncf %16 : vector<8x16xf32> to vector<8x16xbf16>
    %c0_9 = arith.constant 0 : index
    %c0_10 = arith.constant 0 : index
    %c0_11 = arith.constant 0 : index
    %18 = vector.load %arg6[%c0_9, %c0_10, %c0_11] : memref<1x8x16xbf16, #tpu.memory_space<vmem>>, vector<1x8x16xbf16>
    %19 = vector.shape_cast %18 : vector<1x8x16xbf16> to vector<8x16xbf16>
    %20 = vector.shape_cast %17 : vector<8x16xbf16> to vector<1x8x16xbf16>
    tpu.vector_store %arg6[%c0_9, %c0_10, %c0_11], %20 {strides = array<i32>} : memref<1x8x16xbf16, #tpu.memory_space<vmem>>, vector<1x8x16xbf16>,
    %c0_12 = arith.constant 0 : index
    %c0_13 = arith.constant 0 : index
    %21 = vector.load %arg5[%c0_12, %c0_13] : memref<32x8xbf16, #tpu.memory_space<vmem>>, vector<32x8xbf16>
    %cst_14 = arith.constant dense<0.000000e+00> : vector<8x8xf32>
    %22 = tpu.matmul %1, %21, %cst_14 {dimension_numbers = #tpu.dot_dimension_numbers<[1], [0], [0], [1], [0, 0, 1, 1], [], []>} : vector<8x32xbf16>, vector<32x8xbf16>, vector<8x8xf32> -> vector<8x8xf32>
    %23 = arith.truncf %22 : vector<8x8xf32> to vector<8x8xbf16>
    %c0_15 = arith.constant 0 : index
    %c0_16 = arith.constant 0 : index
    %c0_17 = arith.constant 0 : index
    %24 = vector.load %arg7[%c0_15, %c0_16, %c0_17] : memref<1x8x8xbf16, #tpu.memory_space<vmem>>, vector<1x8x8xbf16>
    %25 = vector.shape_cast %24 : vector<1x8x8xbf16> to vector<8x8xbf16>
    %26 = vector.shape_cast %23 : vector<8x8xbf16> to vector<1x8x8xbf16>
    tpu.vector_store %arg7[%c0_15, %c0_16, %c0_17], %26 {strides = array<i32>} : memref<1x8x8xbf16, #tpu.memory_space<vmem>>, vector<1x8x8xbf16>,
    return
  }
  func.func @transform_0(%arg0: i32, %arg1: i32) -> (i32, i32, i32) {
    %c0_i32 = arith.constant 0 : i32
    %c0_i32_0 = arith.constant 0 : i32
    return %arg0, %arg1, %c0_i32 : i32, i32, i32
  }
  func.func @transform_1(%arg0: i32, %arg1: i32) -> (i32, i32) {
    %c0_i32 = arith.constant 0 : i32
    %c0_i32_0 = arith.constant 0 : i32
    %c0_i32_1 = arith.constant 0 : i32
    return %c0_i32, %c0_i32_0 : i32, i32
  }
  func.func @transform_2(%arg0: i32, %arg1: i32) -> (i32, i32) {
    %c0_i32 = arith.constant 0 : i32
    %c0_i32_0 = arith.constant 0 : i32
    %c0_i32_1 = arith.constant 0 : i32
    return %c0_i32, %c0_i32_0 : i32, i32
  }
  func.func @transform_3(%arg0: i32, %arg1: i32) -> (i32, i32) {
    %c0_i32 = arith.constant 0 : i32
    %c0_i32_0 = arith.constant 0 : i32
    %c0_i32_1 = arith.constant 0 : i32
    return %c0_i32, %c0_i32_0 : i32, i32
  }
  func.func @transform_4(%arg0: i32, %arg1: i32) -> (i32, i32, i32) {
    %c0_i32 = arith.constant 0 : i32
    %c0_i32_0 = arith.constant 0 : i32
    return %arg0, %arg1, %c0_i32 : i32, i32, i32
  }
  func.func @transform_5(%arg0: i32, %arg1: i32) -> (i32, i32, i32) {
    %c0_i32 = arith.constant 0 : i32
    %c0_i32_0 = arith.constant 0 : i32
    return %arg0, %arg1, %c0_i32 : i32, i32, i32
  }
}

</mosaic_0001>

<llo_original>
// kernel: tpu_custom_call.1
$region0: #{tpu_custom_call.1}
  #allocation0 [shape = 'u32[]', space=smem, size = 0x4, offset = 0x4, fixed_abs, tag = 'smem constant byte address 0x4 - core index']
  #allocation1 [shape = 'u32[144,128]{1,0:T(1,128)}', space=vmem, size = 0x12000, scoped, tag = 'internal scratch']
  %s0 = inlined_call_operand.vmem [shape: bf16[2,8,32], index: 0, kind: input, shape index: {}]
  %s1 = inlined_call_operand.vmem [shape: bf16[32,16], index: 1, kind: input, shape index: {}]
  %s2 = inlined_call_operand.vmem [shape: f32[1,16], index: 2, kind: input, shape index: {}]
  %s3 = inlined_call_operand.vmem [shape: bf16[32,8], index: 3, kind: input, shape index: {}]
  %s4 = inlined_call_operand.hbm [shape: bf16[2,8,16], index: 4, kind: output, shape index: {0}]
  %s5 = inlined_call_operand.hbm [shape: bf16[2,8,8], index: 5, kind: output, shape index: {1}]
  %6 = xla_tuple %s4, %s5
  %s7 = sld [smem:[#allocation0]]
  $region57: #{tpu_custom_call.1} parent=0
    _
  %s9 = ssub.s32 1, %s7
  %s10 = scalar_select 0, %s9, %s7
  $region1: #{tpu_custom_call.1} parent=0
    #allocation2 [shape = 'u8[4096]{0}', space=vmem, size = 0x1000, scoped, tag = 'output window, operand 0']
    #allocation3 [shape = 's32[2]{0}', space=sflag, size = 0x8, scoped, tag = 'scoped memory for tpu_custom_call.1']
    #allocation4 [shape = 'u8[4096]{0}', space=vmem, size = 0x1000, scoped, tag = 'output window, operand 1']
    #allocation5 [shape = 's32[2]{0}', space=sflag, size = 0x8, scoped, tag = 'scoped memory for tpu_custom_call.1']
    %11 = vsyncpa [#allocation3], 0
    %s12 = scalar_lea.sflag [#allocation3], 1
    %13 = vsyncpa %s12, 0
    %14 = vsyncpa [#allocation5], 0
    %s15 = scalar_lea.sflag [#allocation5], 1
    %16 = vsyncpa %s15, 0
    loop: start=0, step=1, limit=4
    $region2: #{tpu_custom_call.1} parent=1 // loop_pre_header
      _
    $region3: #{tpu_custom_call.1} parent=1 // loop_header
      %s18 = sphi 0, %s22
      %p19 = scmp.ge.s32.totalorder %s18, 4
      %s25 = sphi 0, %s37
      %s26 = sphi 0, %s33
      %s27 = sphi 0, %s25
      %s28 = sphi 0, %s26
      %s29 = sphi 0, %s27
      %s30 = sphi 0, %s28
      %s42 = sphi 0, %s44
      %s45 = sphi 0, %s42
      %s46 = sphi 0, %s45
      %s62 = sphi 0, %s46
      %s66 = sphi 0, %s66
      %s68 = sphi 0, %s66
      %s69 = sphi 0, %s68
      %s83 = sphi 0, %s69
      %s87 = sphi 0, %s87
      %s89 = sphi 0, %s87
      %s90 = sphi 0, %s89
      %s104 = sphi 0, %s90
      %s108 = sphi 0, %s108
      %s110 = sphi 0, %s108
      %s111 = sphi 0, %s110
      %s125 = sphi 0, %s111
      %s133 = sphi 0, %s135
      %s136 = sphi 0, %s133
      %s137 = sphi 0, %s136
      %s153 = sphi 0, %s137
      %s161 = sphi 0, %s163
      %s164 = sphi 0, %s161
      %s165 = sphi 0, %s164
      %s181 = sphi 0, %s165
    $region4: #{tpu_custom_call.1} parent=1 // loop_header_branch
      %21 = sbr.rel (%p19) target = $region8
    $region5: #{tpu_custom_call.1} parent=1 // loop_body
      %s23 = ssub.s32 %s18, 1
      %s24 = ssub.s32 %s18, 2
      %s31 = sadd.s32 1, %s26
      %p32 = scmp.ge.s32.totalorder %s31, 1
      %s33 = scalar_select %p32, 0, %s31
      %s34 = sadd.s32 1, %s25
      %s35 = scalar_select %p32, %s34, %s25
      %p36 = scmp.ge.s32.totalorder %s35, 2
      %s37 = scalar_select %p36, 0, %s35
      %s38 = ssub.s32 %s25, %s37
      %s39 = ssub.s32 %s26, %s33
      %s40 = sor.u32 %s38, %s39
      %p41 = scmp.eq.s32.totalorder %s40, 0
      %s43 = sadd.s32 %s42, 1
      %s44 = scalar_select %p41, %s42, %s43
      %p47 = pneg %p41
      %p48 = scmp.eq.s32.totalorder %s18, 1
      %p49 = por %p47, %p48
      %p50 = scmp.ne.s32.totalorder %s42, %s45
      %p51 = scmp.eq.s32.totalorder %s18, 0
      %p52 = por %p50, %p51
      %p53 = scmp.ne.s32.totalorder %s42, %s45
      %p54 = scmp.eq.s32.totalorder %s23, 1
      %p55 = por %p53, %p54
      %p56 = scmp.ne.s32.totalorder %s45, %s46
      %p57 = scmp.eq.s32.totalorder %s23, 0
      %p58 = por %p56, %p57
      %p59 = scmp.ne.s32.totalorder %s45, %s46
      %p60 = scmp.eq.s32.totalorder %s24, 1
      %p61 = por %p59, %p60
      %p63 = scmp.ne.s32.totalorder %s46, %s62
      %p64 = scmp.eq.s32.totalorder %s24, 0
      %p65 = por %p63, %p64
      %s67 = sadd.s32 %s66, 1
      %p70 = scmp.eq.s32.totalorder %s18, 1
      %p71 = scmp.ne.s32.totalorder %s66, %s68
      %p72 = scmp.eq.s32.totalorder %s18, 0
      %p73 = por %p71, %p72
      %p74 = scmp.ne.s32.totalorder %s66, %s68
      %p75 = scmp.eq.s32.totalorder %s23, 1
      %p76 = por %p74, %p75
      %p77 = scmp.ne.s32.totalorder %s68, %s69
      %p78 = scmp.eq.s32.totalorder %s23, 0
      %p79 = por %p77, %p78
      %p80 = scmp.ne.s32.totalorder %s68, %s69
      %p81 = scmp.eq.s32.totalorder %s24, 1
      %p82 = por %p80, %p81
      %p84 = scmp.ne.s32.totalorder %s69, %s83
      %p85 = scmp.eq.s32.totalorder %s24, 0
      %p86 = por %p84, %p85
      %s88 = sadd.s32 %s87, 1
      %p91 = scmp.eq.s32.totalorder %s18, 1
      %p92 = scmp.ne.s32.totalorder %s87, %s89
      %p93 = scmp.eq.s32.totalorder %s18, 0
      %p94 = por %p92, %p93
      %p95 = scmp.ne.s32.totalorder %s87, %s89
      %p96 = scmp.eq.s32.totalorder %s23, 1
      %p97 = por %p95, %p96
      %p98 = scmp.ne.s32.totalorder %s89, %s90
      %p99 = scmp.eq.s32.totalorder %s23, 0
      %p100 = por %p98, %p99
      %p101 = scmp.ne.s32.totalorder %s89, %s90
      %p102 = scmp.eq.s32.totalorder %s24, 1
      %p103 = por %p101, %p102
      %p105 = scmp.ne.s32.totalorder %s90, %s104
      %p106 = scmp.eq.s32.totalorder %s24, 0
      %p107 = por %p105, %p106
      %s109 = sadd.s32 %s108, 1
      %p112 = scmp.eq.s32.totalorder %s18, 1
      %p113 = scmp.ne.s32.totalorder %s108, %s110
      %p114 = scmp.eq.s32.totalorder %s18, 0
      %p115 = por %p113, %p114
      %p116 = scmp.ne.s32.totalorder %s108, %s110
      %p117 = scmp.eq.s32.totalorder %s23, 1
      %p118 = por %p116, %p117
      %p119 = scmp.ne.s32.totalorder %s110, %s111
      %p120 = scmp.eq.s32.totalorder %s23, 0
      %p121 = por %p119, %p120
      %p122 = scmp.ne.s32.totalorder %s110, %s111
      %p123 = scmp.eq.s32.totalorder %s24, 1
      %p124 = por %p122, %p123
      %p126 = scmp.ne.s32.totalorder %s111, %s125
      %p127 = scmp.eq.s32.totalorder %s24, 0
      %p128 = por %p126, %p127
      %s129 = ssub.s32 %s25, %s37
      %s130 = ssub.s32 %s26, %s33
      %s131 = sor.u32 %s129, %s130
      %p132 = scmp.eq.s32.totalorder %s131, 0
      %s134 = sadd.s32 %s133, 1
      %s135 = scalar_select %p132, %s133, %s134
      %p138 = pneg %p132
      %p139 = scmp.eq.s32.totalorder %s18, 1
      %p140 = por %p138, %p139
      %p141 = scmp.ne.s32.totalorder %s133, %s136
      %p142 = scmp.eq.s32.totalorder %s18, 0
      %p143 = por %p141, %p142
      %p144 = scmp.ne.s32.totalorder %s133, %s136
      %p145 = scmp.eq.s32.totalorder %s23, 1
      %p146 = por %p144, %p145
      %p147 = scmp.ne.s32.totalorder %s136, %s137
      %p148 = scmp.eq.s32.totalorder %s23, 0
      %p149 = por %p147, %p148
      %p150 = scmp.ne.s32.totalorder %s136, %s137
      %p151 = scmp.eq.s32.totalorder %s24, 1
      %p152 = por %p150, %p151
      %p154 = scmp.ne.s32.totalorder %s137, %s153
      %p155 = scmp.eq.s32.totalorder %s24, 0
      %p156 = por %p154, %p155
      %s157 = ssub.s32 %s25, %s37
      %s158 = ssub.s32 %s26, %s33
      %s159 = sor.u32 %s157, %s158
      %p160 = scmp.eq.s32.totalorder %s159, 0
      %s162 = sadd.s32 %s161, 1
      %s163 = scalar_select %p160, %s161, %s162
      %p166 = pneg %p160
      %p167 = scmp.eq.s32.totalorder %s18, 1
      %p168 = por %p166, %p167
      %p169 = scmp.ne.s32.totalorder %s161, %s164
      %p170 = scmp.eq.s32.totalorder %s18, 0
      %p171 = por %p169, %p170
      %p172 = scmp.ne.s32.totalorder %s161, %s164
      %p173 = scmp.eq.s32.totalorder %s23, 1
      %p174 = por %p172, %p173
      %p175 = scmp.ne.s32.totalorder %s164, %s165
      %p176 = scmp.eq.s32.totalorder %s23, 0
      %p177 = por %p175, %p176
      %p178 = scmp.ne.s32.totalorder %s164, %s165
      %p179 = scmp.eq.s32.totalorder %s24, 1
      %p180 = por %p178, %p179
      %p182 = scmp.ne.s32.totalorder %s165, %s181
      %p183 = scmp.eq.s32.totalorder %s24, 0
      %p184 = por %p182, %p183
      %p185 = scmp.le.s32.totalorder 1, %s18
      %p186 = scmp.lt.s32.totalorder %s18, 3
      %p187 = pnand %p185, %p186
      %p188 = pneg %p187
      // Predicated region
      $region9: #{tpu_custom_call.1} parent=5 // pred_check
        _
      $region10: #{tpu_custom_call.1} parent=5 // pred_check_branch
        %190 = sbr.rel (%p187) target = $region12
      $region11: #{tpu_custom_call.1} parent=5 // pred_region
        %s191 = ssub.s32 %s18, 1
        // Predicated region
        $region13: #{tpu_custom_call.1} parent=11 // pred_check
          %p192 = pneg %p79
        $region14: #{tpu_custom_call.1} parent=11 // pred_check_branch
          %194 = sbr.rel (%p192) target = $region16
        $region15: #{tpu_custom_call.1} parent=11 // pred_region
          _
        $region16: #{tpu_custom_call.1} parent=11 // pred_fallthru
          _
        // Predicated region
        $region17: #{tpu_custom_call.1} parent=11 // pred_check
          %p195 = pneg %p100
        $region18: #{tpu_custom_call.1} parent=11 // pred_check_branch
          %197 = sbr.rel (%p195) target = $region20
        $region19: #{tpu_custom_call.1} parent=11 // pred_region
          _
        $region20: #{tpu_custom_call.1} parent=11 // pred_fallthru
          _
        // Predicated region
        $region21: #{tpu_custom_call.1} parent=11 // pred_check
          %p198 = pneg %p121
        $region22: #{tpu_custom_call.1} parent=11 // pred_check_branch
          %200 = sbr.rel (%p198) target = $region24
        $region23: #{tpu_custom_call.1} parent=11 // pred_region
          _
        $region24: #{tpu_custom_call.1} parent=11 // pred_fallthru
          _
      $region12: #{tpu_custom_call.1} parent=5 // pred_fallthru
        _
      %p201 = scmp.lt.s32.totalorder %s18, 2
      // Predicated region
      $region25: #{tpu_custom_call.1} parent=5 // pred_check
        %p202 = pneg %p201
      $region26: #{tpu_custom_call.1} parent=5 // pred_check_branch
        %204 = sbr.rel (%p202) target = $region28
      $region27: #{tpu_custom_call.1} parent=5 // pred_region
        // Predicated region
        $region29: #{tpu_custom_call.1} parent=27 // pred_check
          %p205 = pneg %p52
        $region30: #{tpu_custom_call.1} parent=27 // pred_check_branch
          %207 = sbr.rel (%p205) target = $region32
        $region31: #{tpu_custom_call.1} parent=27 // pred_region
          %p208 = scmp.lt.s32.totalorder %s25, 1
          %s209 = scalar_select %p208, %s25, 1
          %p210 = scmp.lt.s32.totalorder %s26, 0
          %s211 = scalar_select %p210, %s26, 0
          %s212 = sadd.s32 %s211, %s209
          %s213 = smul.addr %s212, 4
          %s214 = scalar_lea.vmem %s0, %s213
        $region32: #{tpu_custom_call.1} parent=27 // pred_fallthru
          _
      $region28: #{tpu_custom_call.1} parent=5 // pred_fallthru
        _
      %p215 = scmp.le.s32.totalorder 1, %s18
      %p216 = scmp.lt.s32.totalorder %s18, 3
      %p217 = pnand %p215, %p216
      %p218 = pneg %p217
      // Predicated region
      $region33: #{tpu_custom_call.1} parent=5 // pred_check
        _
      $region34: #{tpu_custom_call.1} parent=5 // pred_check_branch
        %220 = sbr.rel (%p217) target = $region36
      $region35: #{tpu_custom_call.1} parent=5 // pred_region
        %s221 = ssub.s32 %s18, 1
        %p222 = scmp.lt.s32.totalorder %s27, 1
        %s223 = scalar_select %p222, %s27, 1
        %p224 = scmp.lt.s32.totalorder %s28, 0
        %s225 = scalar_select %p224, %s28, 0
        %s226 = sadd.s32 %s225, %s223
        %s227 = smul.addr %s226, 4
        %s228 = scalar_lea.vmem %s0, %s227
        %p229 = pneg %p58
        %p230 = pneg %p55
        %p231 = pneg %p79
        %p232 = pneg %p76
        %p233 = pneg %p100
        %p234 = pneg %p97
        %p235 = pneg %p121
        %p236 = pneg %p118
        %p237 = pneg %p149
        %p238 = pneg %p146
        %s239 = sand.u32 %s136, 1
        %s240 = scalar_lea.sflag [#allocation3], %s239
        %s241 = sand.u32 %s136, 1
        %s242 = smul.addr %s241, 4
        %s243 = scalar_lea.vmem [#allocation2], %s242
        %p244 = pneg %p177
        %p245 = pneg %p174
        %s246 = sand.u32 %s164, 1
        %s247 = scalar_lea.sflag [#allocation5], %s246
        %s248 = sand.u32 %s164, 1
        %s249 = smul.addr %s248, 4
        %s250 = scalar_lea.vmem [#allocation4], %s249
        %p251 = scmp.lt.s32.totalorder %s27, 1
        %s252 = scalar_select %p251, %s27, 1
        %p253 = scmp.lt.s32.totalorder %s28, 0
        %s254 = scalar_select %p253, %s28, 0
        %s255 = sadd.s32 %s254, %s252
        %s256 = smul.addr %s255, 4
        %s257 = scalar_lea.vmem %s0, %s256
        %v259 = vld [vmem:[%s257] sm:$0xf]
        %v260 = vld [vmem:[%s1] sm:$0xf]
        %v261 = vld [vmem:[%s1 + $0x4] sm:$0xf]
        %v262 = vld [vmem:[%s1 + $0x8] sm:$0xf]
        %v263 = vld [vmem:[%s1 + $0xc] sm:$0xf]
        %v268 = vunpack.c.l.b16 %v260
        %v269 = vunpack.c.l.b16 %v261
        %v270 = vunpack.c.l.b16 %v262
        %v271 = vunpack.c.l.b16 %v263
        %v272 = vpack.c.b16 %v269, %v268
        %v273 = vpack.c.b16 %v271, %v270
        %vm276 = vcmask 261120
        %v278 = vsel %vm276, %v259, 0
        %280 = vmatprep.subr.bf16.mxu0 0
        %281 = vmatpush1.bf16.msra.mxu0 %v272
        %282 = vmatprep.subr.bf16.mxu0 0
        %283 = vmatpush1.bf16.msra.mxu0 %v273
        %284 = vmatprep.subr.bf16.mxu0 0
        %285 = vmatpush1.bf16.msra.mxu0 0
        %286 = vmatprep.subr.bf16.mxu0 0
        %287 = vmatpush1.bf16.msra.mxu0 0
        %288 = vmatprep.subr.bf16.mxu0 0
        %289 = vmatpush1.bf16.msra.mxu0 0
        %290 = vmatprep.subr.bf16.mxu0 0
        %291 = vmatpush1.bf16.msra.mxu0 0
        %292 = vmatprep.subr.bf16.mxu0 0
        %293 = vmatpush1.bf16.msra.mxu0 0
        %294 = vmatprep.subr.bf16.mxu0 0
        %295 = vmatpush1.bf16.msra.mxu0 0
        %296 = vmatprep.subr.bf16.mxu0 0
        %297 = vmatpush1.bf16.msra.mxu0 0
        %298 = vmatprep.subr.bf16.mxu0 0
        %299 = vmatpush1.bf16.msra.mxu0 0
        %300 = vmatprep.subr.bf16.mxu0 0
        %301 = vmatpush1.bf16.msra.mxu0 0
        %302 = vmatprep.subr.bf16.mxu0 0
        %303 = vmatpush1.bf16.msra.mxu0 0
        %304 = vmatprep.subr.bf16.mxu0 0
        %305 = vmatpush1.bf16.msra.mxu0 0
        %306 = vmatprep.subr.bf16.mxu0 0
        %307 = vmatpush1.bf16.msra.mxu0 0
        %308 = vmatprep.subr.bf16.mxu0 0
        %309 = vmatpush1.bf16.msra.mxu0 0
        %310 = vmatprep.subr.bf16.mxu0 0
        %311 = vmatpush1.bf16.msra.mxu0 0
        %312 = vmatprep.mubr.bf16.mxu0 0
        %313 = vmatmul.mubr.bf16.gmra.mrb[0].mxu0 %v278
        %v314 = vpop.f32.mrb[0].mxu0
        %v315 = vadd.f32 0.0, %v314
        %v316 = vpop.f32.mrb[0].mxu0
        %v317 = vpop.f32.mrb[0].mxu0
        %v318 = vpop.f32.mrb[0].mxu0
        %319 = vdwg.mxu0
        %v320 = vld [vmem:[%s2] sm:$0x1]
        %v321 = vmul.f32 %v315, %v315
        %vm322 = vcmask 130048
        %v323 = vsel %vm322, %v321, 0.0
        %324 = vadd.xlane.f32.xlu0 %v323
        %v325 = vpop.xlane.xlu0 %324
        %v326 = vrcp.pop 16.0
        %v327 = vmul.f32 %v325, %v326
        %v328 = vadd.f32 %v327, 1.1920929e-07
        %v329 = vrsqrt.pop %v328
        %v330 = vmul.f32 %v315, %v329
        %v332 = vlaneseq
        %v333 = vshrl.u32 %v332, 7
        %v334 = vsub.s32 0, %v333
        %v335 = vrot.slane %v320, %v334
        %v337 = vmul.f32 %v330, %v335
        %v338 = vpack.c.bf16 %v337, %v337
        %vm339 = vcmask 125952
        %340 = vst.msk [vmem:[%s243] sm:$0xf] %vm339, %v338
        %v341 = vld [vmem:[%s3] sm:$0xf]
        %v342 = vld [vmem:[%s3 + $0x4] sm:$0xf]
        %v343 = vld [vmem:[%s3 + $0x8] sm:$0xf]
        %v344 = vld [vmem:[%s3 + $0xc] sm:$0xf]
        %v349 = vunpack.c.l.b16 %v341
        %v350 = vunpack.c.l.b16 %v342
        %v351 = vunpack.c.l.b16 %v343
        %v352 = vunpack.c.l.b16 %v344
        %v353 = vpack.c.b16 %v350, %v349
        %v354 = vpack.c.b16 %v352, %v351
        %357 = vmatprep.subr.bf16.mxu0 0
        %358 = vmatpush1.bf16.msra.mxu0 %v353
        %359 = vmatprep.subr.bf16.mxu0 0
        %360 = vmatpush1.bf16.msra.mxu0 %v354
        %361 = vmatprep.subr.bf16.mxu0 0
        %362 = vmatpush1.bf16.msra.mxu0 0
        %363 = vmatprep.subr.bf16.mxu0 0
        %364 = vmatpush1.bf16.msra.mxu0 0
        %365 = vmatprep.subr.bf16.mxu0 0
        %366 = vmatpush1.bf16.msra.mxu0 0
        %367 = vmatprep.subr.bf16.mxu0 0
        %368 = vmatpush1.bf16.msra.mxu0 0
        %369 = vmatprep.subr.bf16.mxu0 0
        %370 = vmatpush1.bf16.msra.mxu0 0
        %371 = vmatprep.subr.bf16.mxu0 0
        %372 = vmatpush1.bf16.msra.mxu0 0
        %373 = vmatprep.subr.bf16.mxu0 0
        %374 = vmatpush1.bf16.msra.mxu0 0
        %375 = vmatprep.subr.bf16.mxu0 0
        %376 = vmatpush1.bf16.msra.mxu0 0
        %377 = vmatprep.subr.bf16.mxu0 0
        %378 = vmatpush1.bf16.msra.mxu0 0
        %379 = vmatprep.subr.bf16.mxu0 0
        %380 = vmatpush1.bf16.msra.mxu0 0
        %381 = vmatprep.subr.bf16.mxu0 0
        %382 = vmatpush1.bf16.msra.mxu0 0
        %383 = vmatprep.subr.bf16.mxu0 0
        %384 = vmatpush1.bf16.msra.mxu0 0
        %385 = vmatprep.subr.bf16.mxu0 0
        %386 = vmatpush1.bf16.msra.mxu0 0
        %387 = vmatprep.subr.bf16.mxu0 0
        %388 = vmatpush1.bf16.msra.mxu0 0
        %389 = vmatprep.mubr.bf16.mxu0 0
        %390 = vmatmul.mubr.bf16.gmra.mrb[0].mxu0 %v278
        %v391 = vpop.f32.mrb[0].mxu0
        %v392 = vadd.f32 0.0, %v391
        %v393 = vpop.f32.mrb[0].mxu0
        %v394 = vpop.f32.mrb[0].mxu0
        %v395 = vpop.f32.mrb[0].mxu0
        %396 = vdwg.mxu0
        %v397 = vpack.c.bf16 %v392, %v392
        %vm398 = vcmask 60416
        %399 = vst.msk [vmem:[%s250] sm:$0xf] %vm398, %v397
        %s400 = sand.u32 %s136, 1
        %s401 = scalar_lea.sflag [#allocation3], %s400
        %s402 = sand.u32 %s136, 1
        %s403 = smul.addr %s402, 4
        %s404 = scalar_lea.vmem [#allocation2], %s403
        %s405 = sand.u32 %s164, 1
        %s406 = scalar_lea.sflag [#allocation5], %s405
        %s407 = sand.u32 %s164, 1
        %s408 = smul.addr %s407, 4
        %s409 = scalar_lea.vmem [#allocation4], %s408
        // Predicated region
        $region37: #{tpu_custom_call.1} parent=35 // pred_check
          %p410 = pneg %p146
        $region38: #{tpu_custom_call.1} parent=35 // pred_check_branch
          %412 = sbr.rel (%p410) target = $region40
        $region39: #{tpu_custom_call.1} parent=35 // pred_region
          %s414 = ssub.s32 64, 64
          %415 = vsyncadd %s401, %s414
          %s416 = sadd.s32 %s28, %s27
          %s417 = smul.addr %s416, 64
          %s418 = scalar_lea.hbm %s4, %s417
          %s420 = sshll.u32 %s404, 4
          %s421 = int_to_ptr.vmem [resolvable:$true] %s420
          %423 = dma.vmem_to_hbm [thread:$0]  %s421, 64, %s418, %s401
        $region40: #{tpu_custom_call.1} parent=35 // pred_fallthru
          _
        // Predicated region
        $region41: #{tpu_custom_call.1} parent=35 // pred_check
          %p424 = pneg %p174
        $region42: #{tpu_custom_call.1} parent=35 // pred_check_branch
          %426 = sbr.rel (%p424) target = $region44
        $region43: #{tpu_custom_call.1} parent=35 // pred_region
          %s428 = ssub.s32 64, 64
          %429 = vsyncadd %s406, %s428
          %s430 = sadd.s32 %s28, %s27
          %s431 = smul.addr %s430, 64
          %s432 = scalar_lea.hbm %s5, %s431
          %s434 = sshll.u32 %s409, 4
          %s435 = int_to_ptr.vmem [resolvable:$true] %s434
          %437 = dma.vmem_to_hbm [thread:$0]  %s435, 64, %s432, %s406
        $region44: #{tpu_custom_call.1} parent=35 // pred_fallthru
          _
      $region36: #{tpu_custom_call.1} parent=5 // pred_fallthru
        _
      %p438 = scmp.le.s32.totalorder 2, %s18
      // Predicated region
      $region45: #{tpu_custom_call.1} parent=5 // pred_check
        %p439 = pneg %p438
      $region46: #{tpu_custom_call.1} parent=5 // pred_check_branch
        %441 = sbr.rel (%p439) target = $region48
      $region47: #{tpu_custom_call.1} parent=5 // pred_region
        %s442 = ssub.s32 %s18, 2
        // Predicated region
        $region49: #{tpu_custom_call.1} parent=47 // pred_check
          %p443 = pneg %p152
        $region50: #{tpu_custom_call.1} parent=47 // pred_check_branch
          %445 = sbr.rel (%p443) target = $region52
        $region51: #{tpu_custom_call.1} parent=47 // pred_region
          %s446 = sand.u32 %s137, 1
          %s447 = scalar_lea.sflag [#allocation3], %s446
          %s448 = sand.u32 %s137, 1
          %s449 = smul.addr %s448, 4
          %s450 = scalar_lea.vmem [#allocation2], %s449
          %451 = dma.done %s447, 64
        $region52: #{tpu_custom_call.1} parent=47 // pred_fallthru
          _
        // Predicated region
        $region53: #{tpu_custom_call.1} parent=47 // pred_check
          %p452 = pneg %p180
        $region54: #{tpu_custom_call.1} parent=47 // pred_check_branch
          %454 = sbr.rel (%p452) target = $region56
        $region55: #{tpu_custom_call.1} parent=47 // pred_region
          %s455 = sand.u32 %s165, 1
          %s456 = scalar_lea.sflag [#allocation5], %s455
          %s457 = sand.u32 %s165, 1
          %s458 = smul.addr %s457, 4
          %s459 = scalar_lea.vmem [#allocation4], %s458
          %460 = dma.done %s456, 64
        $region56: #{tpu_custom_call.1} parent=47 // pred_fallthru
          _
      $region48: #{tpu_custom_call.1} parent=5 // pred_fallthru
        _
    $region6: #{tpu_custom_call.1} parent=1 // loop_footer
      %s22 = sadd.s32 1, %s18
    $region7: #{tpu_custom_call.1} parent=1 // loop_footer_branch
      %17 = sbr.rel target = $region3
    $region8: #{tpu_custom_call.1} parent=1 // loop_exit
      _
    %461 = vsyncpa [#allocation3], 1
    %s462 = scalar_lea.sflag [#allocation3], 1
    %463 = vsyncpa %s462, 1
    %464 = vsyncpa [#allocation5], 1
    %s465 = scalar_lea.sflag [#allocation5], 1
    %466 = vsyncpa %s465, 1

</llo_original>
